<compile_context>
chip_gen: v6e
topology: v6e:2x2x1
jax: 0.10.0
libtpu: 0.0.40
codegen_flags: <defaults>
</compile_context>

<pallas_src>
import functools

import jax
import jax.numpy as jnp
from jax import lax
from jax.experimental import pallas as pl
from jax.experimental.pallas import tpu as pltpu


# ---------------------- Pallas kernel: hoisted input GEMM ------------------- #

def _input_proj_kernel(x_ref, w_ref, b_ref, gx_ref):
    """gx = x @ [W_ih_fwd | W_ih_bwd] + [b_fwd | b_bwd]   (bf16 MXU, f32 accumulation).

    x_ref:  (Rc, D)   f32   row block of the flattened (T*B, D) activations
    w_ref:  (D, 8H)   bf16  packed along N (N = 256 for H = 32)
    b_ref:  (1, 8H)   f32   combined b_ih + b_hh for both directions
    gx_ref: (Rc, 8H)  f32
    """
    gx_ref[...] = (jnp.dot(x_ref[...].astype(jnp.bfloat16), w_ref[...],
                           preferred_element_type=jnp.float32)
                   + b_ref[...])


def input_projection(x_2d, w_packed_bf16, b_packed, *, rows_per_block):
    M, D = x_2d.shape
    N = w_packed_bf16.shape[1]
    assert M % rows_per_block == 0 and rows_per_block % 8 == 0
    nb = M // rows_per_block
    return pl.pallas_call(
        _input_proj_kernel,
        out_shape=jax.ShapeDtypeStruct((M, N), jnp.float32),
        grid_spec=pltpu.PrefetchScalarGridSpec(
            num_scalar_prefetch=0,
            grid=(nb,),
            in_specs=[
                pl.BlockSpec((rows_per_block, D), lambda i: (i, 0)),
                pl.BlockSpec((D, N), lambda i: (0, 0)),      # resident weights
                pl.BlockSpec((1, N), lambda i: (0, 0)),       # resident bias
            ],
            out_specs=pl.BlockSpec((rows_per_block, N), lambda i: (i, 0)),
        ),
        compiler_params=pltpu.CompilerParams(
            dimension_semantics=("parallel",),
            # sized far below 64 MiB so the same config also fits v7x VMEM
            vmem_limit_bytes=32 * 1024 * 1024),
    )(x_2d, w_packed_bf16, b_packed)


# --------------- Pallas kernel: fused bidirectional recurrence -------------- #

def _bilstm_recurrence_kernel(len_ref, gxf_ref, gxb_ref, whhf_ref, whhb_ref,
                              yf_ref, yb_ref, hid_ref,
                              hf_sc, cf_sc, hb_sc, cb_sc, *, Tc, H):
    """One layer, both directions, one time chunk per grid step.

    len_ref:  (B, 1)       i32   valid lengths
    gxf_ref:  (Tc, B, 4H)  f32   precomputed x@W_ih + b for the forward chunk i
    gxb_ref:  (Tc, B, 4H)  f32   precomputed x@W_ih + b for the backward chunk nc-1-i
    whh*_ref: (H, 4H)      bf16  recurrent weights (resident)
    yf_ref:   (Tc, B, H)   f32   forward per-step hidden (zero at padded steps)
    yb_ref:   (Tc, B, H)   f32   backward per-step hidden (zero at padded steps)
    hid_ref:  (B, 2H)      f32   [h_fwd_final | h_bwd_final], written at the last chunk
    *_sc:     (B, H)       f32   h/c state carried across the (arbitrary) grid axis
    """
    i = pl.program_id(0)
    nc = pl.num_programs(0)

    @pl.when(i == 0)
    def _():
        hf_sc[...] = jnp.zeros_like(hf_sc)
        cf_sc[...] = jnp.zeros_like(cf_sc)
        hb_sc[...] = jnp.zeros_like(hb_sc)
        cb_sc[...] = jnp.zeros_like(cb_sc)

    lengths = len_ref[...]                       # (B, 1) i32
    whh_f = whhf_ref[...]                        # (H, 4H) bf16
    whh_b = whhb_ref[...]

    t0_f = i * Tc                                # first global step of the forward chunk
    t0_b = (nc - 1 - i) * Tc                     # first global step of the backward chunk

    def lstm_cell(g, c):                         # PyTorch gate order (i, f, g, o)
        i_g = jax.nn.sigmoid(g[:, 0 * H:1 * H])
        f_g = jax.nn.sigmoid(g[:, 1 * H:2 * H])
        g_g = jnp.tanh(g[:, 2 * H:3 * H])
        o_g = jax.nn.sigmoid(g[:, 3 * H:4 * H])
        c_new = f_g * c + i_g * g_g
        h_new = o_g * jnp.tanh(c_new)
        return h_new, c_new

    # Statically unrolled chunk loop: only h @ W_hh is left on the serial path, and the
    # unroll gives the scheduler cross-step visibility (MXU / EUP / VPU interleave).
    for s in range(Tc):
        # ---------- forward direction, global time t = t0_f + s ----------
        h, c = hf_sc[...], cf_sc[...]
        g = gxf_ref[s] + jnp.dot(h.astype(jnp.bfloat16), whh_f,
                                 preferred_element_type=jnp.float32)
        h_new, c_new = lstm_cell(g, c)
        m = (t0_f + s) < lengths                 # freeze state past the valid length
        hf_sc[...] = jnp.where(m, h_new, h)
        cf_sc[...] = jnp.where(m, c_new, c)
        yf_ref[s] = jnp.where(m, h_new, 0.0)

        # ---------- backward direction, global time t = t0_b + (Tc-1-s) ----------
        sb = Tc - 1 - s
        h, c = hb_sc[...], cb_sc[...]
        g = gxb_ref[sb] + jnp.dot(h.astype(jnp.bfloat16), whh_b,
                                  preferred_element_type=jnp.float32)
        h_new, c_new = lstm_cell(g, c)
        m = (t0_b + sb) < lengths
        hb_sc[...] = jnp.where(m, h_new, h)
        cb_sc[...] = jnp.where(m, c_new, c)
        yb_ref[sb] = jnp.where(m, h_new, 0.0)

    # Both directions finish their sequences on the last grid step.
    @pl.when(i == nc - 1)
    def _():
        hid_ref[:, 0:H] = hf_sc[...]
        hid_ref[:, H:2 * H] = hb_sc[...]


def bilstm_recurrence(gx_tb8h, lengths_b1, whh_f_bf16, whh_b_bf16, *, H, Tc):
    T, B, G8 = gx_tb8h.shape
    assert G8 == 8 * H and T % Tc == 0
    nc = T // Tc
    kernel = functools.partial(_bilstm_recurrence_kernel, Tc=Tc, H=H)
    yf, yb, hid = pl.pallas_call(
        kernel,
        out_shape=(jax.ShapeDtypeStruct((T, B, H), jnp.float32),
                   jax.ShapeDtypeStruct((T, B, H), jnp.float32),
                   jax.ShapeDtypeStruct((B, 2 * H), jnp.float32)),
        grid_spec=pltpu.PrefetchScalarGridSpec(
            num_scalar_prefetch=0,
            grid=(nc,),
            in_specs=[
                pl.BlockSpec((B, 1), lambda i: (0, 0)),                      # lengths
                pl.BlockSpec((Tc, B, 4 * H), lambda i: (i, 0, 0)),           # gx fwd chunk
                pl.BlockSpec((Tc, B, 4 * H), lambda i: (nc - 1 - i, 0, 1)),  # gx bwd chunk
                pl.BlockSpec((H, 4 * H), lambda i: (0, 0)),                  # W_hh fwd
                pl.BlockSpec((H, 4 * H), lambda i: (0, 0)),                  # W_hh bwd
            ],
            out_specs=[
                pl.BlockSpec((Tc, B, H), lambda i: (i, 0, 0)),               # y fwd
                pl.BlockSpec((Tc, B, H), lambda i: (nc - 1 - i, 0, 0)),      # y bwd
                pl.BlockSpec((B, 2 * H), lambda i: (0, 0)),                  # final hidden
            ],
            scratch_shapes=[pltpu.VMEM((B, H), jnp.float32)] * 4,
        ),
        compiler_params=pltpu.CompilerParams(
            dimension_semantics=("arbitrary",),        # chunks carry state sequentially
            vmem_limit_bytes=32 * 1024 * 1024),
    )(lengths_b1, gx_tb8h, gx_tb8h, whh_f_bf16, whh_b_bf16)
    return yf, yb, hid


# --------------------------------- forward ---------------------------------- #

def lstm_forward(params, ids, lengths, *, hidden_dim, n_layers, time_chunk):
    """Full model forward (eval mode). ids: (B, T) int32, lengths: (B,) int32."""
    B, T = ids.shape
    H = hidden_dim
    lengths_b1 = lengths.reshape(B, 1).astype(jnp.int32)

    # Embedding lookup directly in time-major layout (the only relayout in the net).
    # TODO(synk): dropout is identity (eval-mode semantics).
    x = params["embedding"][ids.T]                          # (T, B, E) f32

    hid = None
    for l in range(n_layers):
        d_in = x.shape[-1]
        wih = jnp.concatenate(
            [params[f"w_ih_l{l}"], params[f"w_ih_l{l}_reverse"]], axis=1
        ).astype(jnp.bfloat16)                              # (d_in, 8H): packed N = 256
        b = jnp.concatenate(
            [params[f"b_l{l}"], params[f"b_l{l}_reverse"]], axis=1)      # (1, 8H) f32
        whh_f = params[f"w_hh_l{l}"].astype(jnp.bfloat16)
        whh_b = params[f"w_hh_l{l}_reverse"].astype(jnp.bfloat16)

        # (1) hoisted input projection: one big packed GEMM over all T*B rows
        gx = input_projection(x.reshape(T * B, d_in), wih, b,
                              rows_per_block=B * time_chunk)
        gx = gx.reshape(T, B, 8 * H)

        # (2) fused bidirectional recurrence streamed over time chunks
        yf, yb, hid = bilstm_recurrence(gx, lengths_b1, whh_f, whh_b,
                                        H=H, Tc=time_chunk)
        x = jnp.concatenate([yf, yb], axis=-1)              # (T, B, 2H) -> next layer

    # fc head: tiny (B, 2H) @ (2H, O) — left to XLA per review.
    return hid @ params["fc_w"] + params["fc_b"]


# --------------------------- pure-JAX reference ------------------------------ #

def lstm_forward_ref(params, ids, lengths, *, hidden_dim, n_layers):
    H = hidden_dim
    B, T = ids.shape
    bf16 = jnp.bfloat16
    x = params["embedding"][ids.T]                          # (T, B, E) f32
    hid = None
    for l in range(n_layers):
        wih_f = params[f"w_ih_l{l}"].astype(bf16)
        wih_b = params[f"w_ih_l{l}_reverse"].astype(bf16)
        whh_f = params[f"w_hh_l{l}"].astype(bf16)
        whh_b = params[f"w_hh_l{l}_reverse"].astype(bf16)
        b_f = params[f"b_l{l}"]
        b_b = params[f"b_l{l}_reverse"]

        gx_f = jnp.einsum("tbd,dk->tbk", x.astype(bf16), wih_f,
                          preferred_element_type=jnp.float32) + b_f
        gx_b = jnp.einsum("tbd,dk->tbk", x.astype(bf16), wih_b,
                          preferred_element_type=jnp.float32) + b_b

        def cell(h, c, g, t, whh):
            g = g + jnp.dot(h.astype(bf16), whh, preferred_element_type=jnp.float32)
            i = jax.nn.sigmoid(g[:, :H])
            f = jax.nn.sigmoid(g[:, H:2 * H])
            gg = jnp.tanh(g[:, 2 * H:3 * H])
            o = jax.nn.sigmoid(g[:, 3 * H:])
            c_new = f * c + i * gg
            h_new = o * jnp.tanh(c_new)
            m = (t < lengths)[:, None]
            return (jnp.where(m, h_new, h), jnp.where(m, c_new, c),
                    jnp.where(m, h_new, 0.0))

        z = jnp.zeros((B, H), jnp.float32)
        ts = jnp.arange(T, dtype=jnp.int32)

        def fstep(carry, inp):
            h, c = carry
            g, t = inp
            h, c, y = cell(h, c, g, t, whh_f)
            return (h, c), y

        (hf, _), yf = lax.scan(fstep, (z, z), (gx_f, ts))

        def bstep(carry, inp):
            h, c = carry
            g, t = inp
            h, c, y = cell(h, c, g, t, whh_b)
            return (h, c), y

        (hb, _), yb = lax.scan(bstep, (z, z), (gx_b, ts), reverse=True)

        x = jnp.concatenate([yf, yb], axis=-1)
        hid = jnp.concatenate([hf, hb], axis=-1)
    return hid @ params["fc_w"] + params["fc_b"]


# -------------------------------- param init --------------------------------- #

def init_params(key, vocab_size, embedding_dim, hidden_dim, output_dim,
                n_layers, pad_index):
    E, H = embedding_dim, hidden_dim
    params = {}
    key, sub = jax.random.split(key)
    emb = 0.1 * jax.random.normal(sub, (vocab_size, E), dtype=jnp.float32)
    params["embedding"] = emb.at[pad_index].set(0.0)        # padding_idx row is zero

    bound = 1.0 / float(H) ** 0.5
    for l in range(n_layers):
        for suffix in ("", "_reverse"):
            d_in = E if l == 0 else 2 * H
            key, k1, k2, k3 = jax.random.split(key, 4)
            params[f"w_ih_l{l}{suffix}"] = jax.random.uniform(
                k1, (d_in, 4 * H), jnp.float32, -bound, bound)
            params[f"w_hh_l{l}{suffix}"] = jax.random.uniform(
                k2, (H, 4 * H), jnp.float32, -bound, bound)
            # combined b_ih + b_hh
            params[f"b_l{l}{suffix}"] = jax.random.uniform(
                k3, (1, 4 * H), jnp.float32, -2 * bound, 2 * bound)

    key, k1, k2 = jax.random.split(key, 3)
    fc_bound = 1.0 / float(2 * H) ** 0.5
    params["fc_w"] = jax.random.uniform(k1, (2 * H, output_dim), jnp.float32,
                                        -fc_bound, fc_bound)
    params["fc_b"] = jax.random.uniform(k2, (1, output_dim), jnp.float32,
                                        -fc_bound, fc_bound)
    return params


# ----------------------------------- main ------------------------------------ #

if __name__ == "__main__":
    vocab_size, embedding_dim, hidden_dim, output_dim = 50, 16, 32, 4
    n_layers, pad_index = 2, 0
    B, T, time_chunk = 2, 8, 4          # 2 time chunks -> exercises the chunked grid

    key = jax.random.PRNGKey(0)
    kparams, kids = jax.random.split(key)
    params = init_params(kparams, vocab_size, embedding_dim, hidden_dim,
                         output_dim, n_layers, pad_index)

    ids = jax.random.randint(kids, (B, T), 1, vocab_size, dtype=jnp.int32)
    lengths = jnp.array([8, 5], dtype=jnp.int32)
    # mimic padded batch: positions beyond length are pad_index
    ids = jnp.where(jnp.arange(T)[None, :] < lengths[:, None], ids, pad_index)

    pred = lstm_forward(params, ids, lengths, hidden_dim=hidden_dim,
                        n_layers=n_layers, time_chunk=time_chunk)
    pred = jax.block_until_ready(pred)

    ref = lstm_forward_ref(params, ids, lengths,
                           hidden_dim=hidden_dim, n_layers=n_layers)
    assert pred.shape == (B, output_dim)
    assert jnp.allclose(pred, ref, rtol=2e-3, atol=2e-3), (pred, ref)
    print("KERNEL_OK")
</pallas_src>

<mosaic_0001>
module attributes {stable_mosaic.version = 11 : i64} {
  func.func @_input_proj_kernel(%arg0: i32, %arg1: memref<8x16xf32, #tpu.memory_space<vmem>>, %arg2: memref<16x256xbf16, #tpu.memory_space<vmem>>, %arg3: memref<1x256xf32, #tpu.memory_space<vmem>>, %arg4: memref<8x256xf32, #tpu.memory_space<vmem>>) attributes {dimension_semantics = [#tpu.dimension_semantics<parallel>], iteration_bounds = array<i64: 2>, scalar_prefetch = 0 : i64, scratch_operands = 0 : i64, tpu.core_type = #tpu.core_type<tc>, window_params = [{transform_indices = @transform_0, window_bounds = array<i64: 8, 16>}, {pipeline_mode = #tpu.pipeline_mode<synchronous>, transform_indices = @transform_1, window_bounds = array<i64: 16, 256>}, {pipeline_mode = #tpu.pipeline_mode<synchronous>, transform_indices = @transform_2, window_bounds = array<i64: 1, 256>}, {transform_indices = @transform_3, window_bounds = array<i64: 8, 256>}]} {
    %c0 = arith.constant 0 : index
    %c0_0 = arith.constant 0 : index
    %0 = vector.load %arg1[%c0, %c0_0] : memref<8x16xf32, #tpu.memory_space<vmem>>, vector<8x16xf32>
    %1 = arith.truncf %0 : vector<8x16xf32> to vector<8x16xbf16>
    %c0_1 = arith.constant 0 : index
    %c0_2 = arith.constant 0 : index
    %2 = vector.load %arg2[%c0_1, %c0_2] : memref<16x256xbf16, #tpu.memory_space<vmem>>, vector<16x256xbf16>
    %cst = arith.constant dense<0.000000e+00> : vector<8x256xf32>
    %3 = tpu.matmul %1, %2, %cst {dimension_numbers = #tpu.dot_dimension_numbers<[1], [0], [0], [1], [0, 0, 1, 1], [], []>} : vector<8x16xbf16>, vector<16x256xbf16>, vector<8x256xf32> -> vector<8x256xf32>
    %c0_3 = arith.constant 0 : index
    %c0_4 = arith.constant 0 : index
    %4 = vector.load %arg3[%c0_3, %c0_4] : memref<1x256xf32, #tpu.memory_space<vmem>>, vector<1x256xf32>
    %5 = vector.broadcast %4 : vector<1x256xf32> to vector<8x256xf32>
    %6 = arith.addf %3, %5 : vector<8x256xf32>
    %c0_5 = arith.constant 0 : index
    %c0_6 = arith.constant 0 : index
    %7 = vector.load %arg4[%c0_5, %c0_6] : memref<8x256xf32, #tpu.memory_space<vmem>>, vector<8x256xf32>
    tpu.vector_store %arg4[%c0_5, %c0_6], %6 {strides = array<i32>} : memref<8x256xf32, #tpu.memory_space<vmem>>, vector<8x256xf32>,
    return
  }
  func.func @transform_0(%arg0: i32) -> (i32, i32) {
    %c0_i32 = arith.constant 0 : i32
    %c0_i32_0 = arith.constant 0 : i32
    return %arg0, %c0_i32 : i32, i32
  }
  func.func @transform_1(%arg0: i32) -> (i32, i32) {
    %c0_i32 = arith.constant 0 : i32
    %c0_i32_0 = arith.constant 0 : i32
    %c0_i32_1 = arith.constant 0 : i32
    return %c0_i32, %c0_i32_0 : i32, i32
  }
  func.func @transform_2(%arg0: i32) -> (i32, i32) {
    %c0_i32 = arith.constant 0 : i32
    %c0_i32_0 = arith.constant 0 : i32
    %c0_i32_1 = arith.constant 0 : i32
    return %c0_i32, %c0_i32_0 : i32, i32
  }
  func.func @transform_3(%arg0: i32) -> (i32, i32) {
    %c0_i32 = arith.constant 0 : i32
    %c0_i32_0 = arith.constant 0 : i32
    return %arg0, %c0_i32 : i32, i32
  }
}

</mosaic_0001>

<llo_original>
// kernel: tpu_custom_call.1
$region0: #{tpu_custom_call.1}
  #allocation0 [shape = 'u32[]', space=smem, size = 0x4, offset = 0x4, fixed_abs, tag = 'smem constant byte address 0x4 - core index']
  #allocation1 [shape = 'u32[144,128]{1,0:T(1,128)}', space=vmem, size = 0x12000, scoped, tag = 'internal scratch']
  %s0 = inlined_call_operand.hbm [shape: f32[16,16], index: 0, kind: input, shape index: {}]
  %s1 = inlined_call_operand.hbm [shape: bf16[16,256], index: 1, kind: input, shape index: {}]
  %s2 = inlined_call_operand.vmem [shape: f32[1,256], index: 2, kind: input, shape index: {}]
  %s3 = inlined_call_operand.hbm [shape: f32[16,256], index: 3, kind: output, shape index: {}]
  %s4 = sld [smem:[#allocation0]]
  $region53: #{tpu_custom_call.1} parent=0
    _
  %s6 = ssub.s32 1, %s4
  %s7 = scalar_select 0, %s6, %s4
  $region1: #{tpu_custom_call.1} parent=0
    #allocation2 [shape = 'u8[8192]{0}', space=vmem, size = 0x2000, scoped, tag = 'input window, operand 0']
    #allocation3 [shape = 's32[2]{0}', space=sflag, size = 0x8, scoped, tag = 'scoped memory for tpu_custom_call.1']
    #allocation4 [shape = 's32[2]{0}', space=sflag, size = 0x8, scoped, tag = 'scoped memory for tpu_custom_call.1']
    #allocation5 [shape = 'u8[8192]{0}', space=vmem, size = 0x2000, scoped, tag = 'input window, operand 1, single buffered']
    #allocation6 [shape = 's32[1]{0}', space=sflag, size = 0x4, scoped, tag = 'scoped memory for tpu_custom_call.1']
    #allocation7 [shape = 'u8[16384]{0}', space=vmem, size = 0x4000, scoped, tag = 'output window, operand 0']
    %8 = vsyncpa [#allocation3], 0
    %s9 = scalar_lea.sflag [#allocation3], 1
    %10 = vsyncpa %s9, 0
    %11 = vsyncpa [#allocation6], 0
    %12 = vsyncpa [#allocation4], 0
    %s13 = scalar_lea.sflag [#allocation4], 1
    %14 = vsyncpa %s13, 0
    loop: start=0, step=1, limit=4
    $region2: #{tpu_custom_call.1} parent=1 // loop_pre_header
      _
    $region3: #{tpu_custom_call.1} parent=1 // loop_header
      %s16 = sphi 0, %s20
      %p17 = scmp.ge.s32.totalorder %s16, 4
      %s26 = sphi 0, %s28
      %s29 = sphi 0, %s26
      %s30 = sphi 0, %s29
      %s46 = sphi 0, %s30
      %s50 = sphi 0, %s50
      %s52 = sphi 0, %s50
      %s53 = sphi 0, %s52
      %s67 = sphi 0, %s53
      %s71 = sphi 0, %s71
      %s73 = sphi 0, %s71
      %s74 = sphi 0, %s73
      %s88 = sphi 0, %s74
      %s94 = sphi 0, %s96
      %s97 = sphi 0, %s94
      %s98 = sphi 0, %s97
      %s114 = sphi 0, %s98
    $region4: #{tpu_custom_call.1} parent=1 // loop_header_branch
      %19 = sbr.rel (%p17) target = $region8
    $region5: #{tpu_custom_call.1} parent=1 // loop_body
      %s21 = ssub.s32 %s16, 1
      %s22 = ssub.s32 %s16, 2
      %s23 = sadd.s32 %s16, 1
      %s24 = ssub.s32 %s16, %s23
      %p25 = scmp.eq.s32.totalorder %s24, 0
      %s27 = sadd.s32 %s26, 1
      %s28 = scalar_select %p25, %s26, %s27
      %p31 = pneg %p25
      %p32 = scmp.eq.s32.totalorder %s16, 1
      %p33 = por %p31, %p32
      %p34 = scmp.ne.s32.totalorder %s26, %s29
      %p35 = scmp.eq.s32.totalorder %s16, 0
      %p36 = por %p34, %p35
      %p37 = scmp.ne.s32.totalorder %s26, %s29
      %p38 = scmp.eq.s32.totalorder %s21, 1
      %p39 = por %p37, %p38
      %p40 = scmp.ne.s32.totalorder %s29, %s30
      %p41 = scmp.eq.s32.totalorder %s21, 0
      %p42 = por %p40, %p41
      %p43 = scmp.ne.s32.totalorder %s29, %s30
      %p44 = scmp.eq.s32.totalorder %s22, 1
      %p45 = por %p43, %p44
      %p47 = scmp.ne.s32.totalorder %s30, %s46
      %p48 = scmp.eq.s32.totalorder %s22, 0
      %p49 = por %p47, %p48
      %s51 = sadd.s32 %s50, 1
      %p54 = scmp.eq.s32.totalorder %s16, 1
      %p55 = scmp.ne.s32.totalorder %s50, %s52
      %p56 = scmp.eq.s32.totalorder %s16, 0
      %p57 = por %p55, %p56
      %p58 = scmp.ne.s32.totalorder %s50, %s52
      %p59 = scmp.eq.s32.totalorder %s21, 1
      %p60 = por %p58, %p59
      %p61 = scmp.ne.s32.totalorder %s52, %s53
      %p62 = scmp.eq.s32.totalorder %s21, 0
      %p63 = por %p61, %p62
      %p64 = scmp.ne.s32.totalorder %s52, %s53
      %p65 = scmp.eq.s32.totalorder %s22, 1
      %p66 = por %p64, %p65
      %p68 = scmp.ne.s32.totalorder %s53, %s67
      %p69 = scmp.eq.s32.totalorder %s22, 0
      %p70 = por %p68, %p69
      %s72 = sadd.s32 %s71, 1
      %p75 = scmp.eq.s32.totalorder %s16, 1
      %p76 = scmp.ne.s32.totalorder %s71, %s73
      %p77 = scmp.eq.s32.totalorder %s16, 0
      %p78 = por %p76, %p77
      %p79 = scmp.ne.s32.totalorder %s71, %s73
      %p80 = scmp.eq.s32.totalorder %s21, 1
      %p81 = por %p79, %p80
      %p82 = scmp.ne.s32.totalorder %s73, %s74
      %p83 = scmp.eq.s32.totalorder %s21, 0
      %p84 = por %p82, %p83
      %p85 = scmp.ne.s32.totalorder %s73, %s74
      %p86 = scmp.eq.s32.totalorder %s22, 1
      %p87 = por %p85, %p86
      %p89 = scmp.ne.s32.totalorder %s74, %s88
      %p90 = scmp.eq.s32.totalorder %s22, 0
      %p91 = por %p89, %p90
      %s92 = ssub.s32 %s16, %s23
      %p93 = scmp.eq.s32.totalorder %s92, 0
      %s95 = sadd.s32 %s94, 1
      %s96 = scalar_select %p93, %s94, %s95
      %p99 = pneg %p93
      %p100 = scmp.eq.s32.totalorder %s16, 1
      %p101 = por %p99, %p100
      %p102 = scmp.ne.s32.totalorder %s94, %s97
      %p103 = scmp.eq.s32.totalorder %s16, 0
      %p104 = por %p102, %p103
      %p105 = scmp.ne.s32.totalorder %s94, %s97
      %p106 = scmp.eq.s32.totalorder %s21, 1
      %p107 = por %p105, %p106
      %p108 = scmp.ne.s32.totalorder %s97, %s98
      %p109 = scmp.eq.s32.totalorder %s21, 0
      %p110 = por %p108, %p109
      %p111 = scmp.ne.s32.totalorder %s97, %s98
      %p112 = scmp.eq.s32.totalorder %s22, 1
      %p113 = por %p111, %p112
      %p115 = scmp.ne.s32.totalorder %s98, %s114
      %p116 = scmp.eq.s32.totalorder %s22, 0
      %p117 = por %p115, %p116
      %p118 = scmp.le.s32.totalorder 1, %s16
      %p119 = scmp.lt.s32.totalorder %s16, 3
      %p120 = pnand %p118, %p119
      %p121 = pneg %p120
      // Predicated region
      $region9: #{tpu_custom_call.1} parent=5 // pred_check
        _
      $region10: #{tpu_custom_call.1} parent=5 // pred_check_branch
        %123 = sbr.rel (%p120) target = $region12
      $region11: #{tpu_custom_call.1} parent=5 // pred_region
        %s124 = ssub.s32 %s16, 1
        // Predicated region
        $region13: #{tpu_custom_call.1} parent=11 // pred_check
          %p125 = pneg %p63
        $region14: #{tpu_custom_call.1} parent=11 // pred_check_branch
          %127 = sbr.rel (%p125) target = $region16
        $region15: #{tpu_custom_call.1} parent=11 // pred_region
          %s129 = ssub.s32 256, 256
          %130 = vsyncadd [#allocation6], %s129
          %s131 = sshll.u32 [#allocation5], 4
          %s132 = int_to_ptr.vmem [resolvable:$true] %s131
          %137 = dma.hbm_to_vmem [thread:$0]  %s1, 256, %s132, [#allocation6], 128, 128, 8
        $region16: #{tpu_custom_call.1} parent=11 // pred_fallthru
          _
        // Predicated region
        $region17: #{tpu_custom_call.1} parent=11 // pred_check
          %p138 = pneg %p84
        $region18: #{tpu_custom_call.1} parent=11 // pred_check_branch
          %140 = sbr.rel (%p138) target = $region20
        $region19: #{tpu_custom_call.1} parent=11 // pred_region
          _
        $region20: #{tpu_custom_call.1} parent=11 // pred_fallthru
          _
      $region12: #{tpu_custom_call.1} parent=5 // pred_fallthru
        _
      %p141 = scmp.lt.s32.totalorder %s16, 2
      // Predicated region
      $region21: #{tpu_custom_call.1} parent=5 // pred_check
        %p142 = pneg %p141
      $region22: #{tpu_custom_call.1} parent=5 // pred_check_branch
        %144 = sbr.rel (%p142) target = $region24
      $region23: #{tpu_custom_call.1} parent=5 // pred_region
        // Predicated region
        $region25: #{tpu_custom_call.1} parent=23 // pred_check
          %p145 = pneg %p36
        $region26: #{tpu_custom_call.1} parent=23 // pred_check_branch
          %147 = sbr.rel (%p145) target = $region28
        $region27: #{tpu_custom_call.1} parent=23 // pred_region
          %s148 = sand.u32 %s26, 1
          %s149 = scalar_lea.sflag [#allocation3], %s148
          %s150 = sand.u32 %s26, 1
          %s151 = smul.addr %s150, 8
          %s152 = scalar_lea.vmem [#allocation2], %s151
          %s154 = ssub.s32 128, 128
          %155 = vsyncadd %s149, %s154
          %s156 = smul.addr %s16, 128
          %s157 = scalar_lea.hbm %s0, %s156
          %s159 = sshll.u32 %s152, 4
          %s160 = int_to_ptr.vmem [resolvable:$true] %s159
          %162 = dma.hbm_to_vmem [thread:$0]  %s157, 128, %s160, %s149
        $region28: #{tpu_custom_call.1} parent=23 // pred_fallthru
          _
      $region24: #{tpu_custom_call.1} parent=5 // pred_fallthru
        _
      %p163 = scmp.le.s32.totalorder 1, %s16
      %p164 = scmp.lt.s32.totalorder %s16, 3
      %p165 = pnand %p163, %p164
      %p166 = pneg %p165
      // Predicated region
      $region29: #{tpu_custom_call.1} parent=5 // pred_check
        _
      $region30: #{tpu_custom_call.1} parent=5 // pred_check_branch
        %168 = sbr.rel (%p165) target = $region32
      $region31: #{tpu_custom_call.1} parent=5 // pred_region
        %s169 = ssub.s32 %s16, 1
        %s170 = sand.u32 %s29, 1
        %s171 = scalar_lea.sflag [#allocation3], %s170
        %s172 = sand.u32 %s29, 1
        %s173 = smul.addr %s172, 8
        %s174 = scalar_lea.vmem [#allocation2], %s173
        // Predicated region
        $region33: #{tpu_custom_call.1} parent=31 // pred_check
          %p175 = pneg %p42
        $region34: #{tpu_custom_call.1} parent=31 // pred_check_branch
          %177 = sbr.rel (%p175) target = $region36
        $region35: #{tpu_custom_call.1} parent=31 // pred_region
          %178 = dma.done %s171, 128
        $region36: #{tpu_custom_call.1} parent=31 // pred_fallthru
          _
        // Predicated region
        $region37: #{tpu_custom_call.1} parent=31 // pred_check
          %p179 = pneg %p63
        $region38: #{tpu_custom_call.1} parent=31 // pred_check_branch
          %181 = sbr.rel (%p179) target = $region40
        $region39: #{tpu_custom_call.1} parent=31 // pred_region
          %182 = dma.done [#allocation6], 256
        $region40: #{tpu_custom_call.1} parent=31 // pred_fallthru
          _
        %s183 = sand.u32 %s29, 1
        %s184 = scalar_lea.sflag [#allocation3], %s183
        %s185 = sand.u32 %s29, 1
        %s186 = smul.addr %s185, 8
        %s187 = scalar_lea.vmem [#allocation2], %s186
        %p188 = pneg %p42
        %p189 = pneg %p39
        %p190 = pneg %p63
        %p191 = pneg %p60
        %p192 = pneg %p84
        %p193 = pneg %p81
        %p194 = pneg %p110
        %p195 = pneg %p107
        %s196 = sand.u32 %s97, 1
        %s197 = scalar_lea.sflag [#allocation4], %s196
        %s198 = sand.u32 %s97, 1
        %s199 = smul.addr %s198, 16
        %s200 = scalar_lea.vmem [#allocation7], %s199
        %v202 = vld [vmem:[%s174] sm:$0xff]
        %v203 = vpack.c.bf16 %v202, %v202
        %v204 = vld [vmem:[#allocation5] sm:$0xff]
        %v205 = vld [vmem:[#allocation5 + $0x8] sm:$0xff]
        %v206 = vld [vmem:[%s2] sm:$0x3]
        %v208 = vlaneseq
        %v209 = vshrl.u32 %v208, 7
        %v210 = vsub.s32 0, %v209
        %v211 = vrot.slane %v206, %v210
        %v212 = vlaneseq
        %v213 = vshrl.u32 %v212, 7
        %v214 = vsub.s32 1, %v213
        %v215 = vrot.slane %v206, %v214
        %v220 = vunpack.c.l.b16 %v204
        %v221 = vunpack.c.h.b16 %v204
        %v222 = vunpack.c.l.b16 %v205
        %v223 = vunpack.c.h.b16 %v205
        %v224 = vpack.c.b16 %v222, %v220
        %v225 = vpack.c.b16 %v223, %v221
        %vm228 = vcmask 130048
        %v230 = vsel %vm228, %v203, 0
        %232 = vmatprep.subr.bf16.mxu0 0
        %233 = vmatpush1.bf16.msra.mxu0 0
        %234 = vmatprep.subr.bf16.mxu0 0
        %235 = vmatpush1.bf16.msra.mxu0 0
        %236 = vmatprep.subr.bf16.mxu0 0
        %237 = vmatpush1.bf16.msra.mxu0 0
        %238 = vmatprep.subr.bf16.mxu0 0
        %239 = vmatpush1.bf16.msra.mxu0 0
        %240 = vmatprep.subr.bf16.mxu0 0
        %241 = vmatpush1.bf16.msra.mxu0 0
        %242 = vmatprep.subr.bf16.mxu0 0
        %243 = vmatpush1.bf16.msra.mxu0 0
        %244 = vmatprep.subr.bf16.mxu0 0
        %245 = vmatpush1.bf16.msra.mxu0 0
        %246 = vmatprep.subr.bf16.mxu0 %v225
        %247 = vmatpush1.bf16.msra.mxu0 %v224
        %248 = vmatprep.subr.bf16.mxu0 0
        %249 = vmatpush2.bf16.msra.mxu0 0
        %250 = vmatprep.subr.bf16.mxu0 0
        %251 = vmatpush2.bf16.msra.mxu0 0
        %252 = vmatprep.subr.bf16.mxu0 0
        %253 = vmatpush2.bf16.msra.mxu0 0
        %254 = vmatprep.subr.bf16.mxu0 0
        %255 = vmatpush2.bf16.msra.mxu0 0
        %256 = vmatprep.subr.bf16.mxu0 0
        %257 = vmatpush2.bf16.msra.mxu0 0
        %258 = vmatprep.subr.bf16.mxu0 0
        %259 = vmatpush2.bf16.msra.mxu0 0
        %260 = vmatprep.subr.bf16.mxu0 0
        %261 = vmatpush2.bf16.msra.mxu0 0
        %262 = vmatprep.subr.bf16.mxu0 0
        %263 = vmatpush2.bf16.msra.mxu0 0
        %264 = vmatprep.mubr.bf16.mxu0 0
        %265 = vmatmul.mubr.bf16.gmra.mxu0 %v230
        %v266 = vpop.f32.mrf.mxu0
        %v267 = vadd.f32 %v211, %v266
        %v268 = vpop.f32.mrf.mxu0
        %v269 = vadd.f32 %v215, %v268
        %v270 = vpop.f32.mrf.mxu0
        %v271 = vpop.f32.mrf.mxu0
        %272 = vdwg.mxu0
        %273 = vst [vmem:[%s200] sm:$0xff] %v267
        %274 = vst [vmem:[%s200 + $0x8] sm:$0xff] %v269
        %s275 = sand.u32 %s97, 1
        %s276 = scalar_lea.sflag [#allocation4], %s275
        %s277 = sand.u32 %s97, 1
        %s278 = smul.addr %s277, 16
        %s279 = scalar_lea.vmem [#allocation7], %s278
        // Predicated region
        $region41: #{tpu_custom_call.1} parent=31 // pred_check
          %p280 = pneg %p107
        $region42: #{tpu_custom_call.1} parent=31 // pred_check_branch
          %282 = sbr.rel (%p280) target = $region44
        $region43: #{tpu_custom_call.1} parent=31 // pred_region
          %s284 = ssub.s32 256, 256
          %285 = vsyncadd %s276, %s284
          %s286 = smul.addr %s21, 2
          %s287 = smul.addr %s286, 128
          %s288 = scalar_lea.hbm %s3, %s287
          %s290 = sshll.u32 %s279, 4
          %s291 = int_to_ptr.vmem [resolvable:$true] %s290
          %293 = dma.vmem_to_hbm [thread:$0]  %s291, 256, %s288, %s276
        $region44: #{tpu_custom_call.1} parent=31 // pred_fallthru
          _
      $region32: #{tpu_custom_call.1} parent=5 // pred_fallthru
        _
      %p294 = scmp.le.s32.totalorder 2, %s16
      // Predicated region
      $region45: #{tpu_custom_call.1} parent=5 // pred_check
        %p295 = pneg %p294
      $region46: #{tpu_custom_call.1} parent=5 // pred_check_branch
        %297 = sbr.rel (%p295) target = $region48
      $region47: #{tpu_custom_call.1} parent=5 // pred_region
        %s298 = ssub.s32 %s16, 2
        // Predicated region
        $region49: #{tpu_custom_call.1} parent=47 // pred_check
          %p299 = pneg %p113
        $region50: #{tpu_custom_call.1} parent=47 // pred_check_branch
          %301 = sbr.rel (%p299) target = $region52
        $region51: #{tpu_custom_call.1} parent=47 // pred_region
          %s302 = sand.u32 %s98, 1
          %s303 = scalar_lea.sflag [#allocation4], %s302
          %s304 = sand.u32 %s98, 1
          %s305 = smul.addr %s304, 16
          %s306 = scalar_lea.vmem [#allocation7], %s305
          %307 = dma.done %s303, 256
        $region52: #{tpu_custom_call.1} parent=47 // pred_fallthru
          _
      $region48: #{tpu_custom_call.1} parent=5 // pred_fallthru
        _
    $region6: #{tpu_custom_call.1} parent=1 // loop_footer
      %s20 = sadd.s32 1, %s16
    $region7: #{tpu_custom_call.1} parent=1 // loop_footer_branch
      %15 = sbr.rel target = $region3
    $region8: #{tpu_custom_call.1} parent=1 // loop_exit
      _
    %308 = vsyncpa [#allocation3], 1
    %s309 = scalar_lea.sflag [#allocation3], 1
    %310 = vsyncpa %s309, 1
    %311 = vsyncpa [#allocation6], 1
    %312 = vsyncpa [#allocation4], 1
    %s313 = scalar_lea.sflag [#allocation4], 1
    %314 = vsyncpa %s313, 1

</llo_original>
